<compile_context>
chip_gen: v5e
topology: v5e:2x2
jax: 0.10.0
libtpu: 0.0.40
codegen_flags: <defaults>
</compile_context>

<pallas_src>
import math

import jax
import jax.numpy as jnp
from jax.experimental import pallas as pl
from jax.experimental.pallas import tpu as pltpu

D_EMBED = 48   # embedding width from the reference Model (D_embed = 48)
V_JOINTS = 25  # norm_data uses BatchNorm1d(dim * 25) -> V is fixed to 25
BN_EPS = 1e-5


def _embed_dy_kernel(x_ref, xp_ref, sp_ref, hp_ref, sdm_ref, hd_ref,
                     wp_ref, wd_ref, bp_ref, bd_ref, out_ref):
    """One grid step = NB batch elements, flattened lane-dense (T*V) layout.

    x_ref   : (NB, C, F)  positions, flat index f = t*V + v
    xp_ref  : (NB, C, F)  previous-frame positions (zero at t==0)
    sp_ref  : (C, F)      joint-branch BN scale, tiled over T
    hp_ref  : (C, F)      joint-branch BN shift, tiled over T
    sdm_ref : (C, F)      dif-branch BN scale, tiled over T, zeroed at t==0
    hd_ref  : (C, F)      dif-branch BN shift, tiled over T
    wp_ref  : (D, C)      joint_embed 1x1-conv weight (untiled)
    wd_ref  : (D, C)      dif_embed   1x1-conv weight (untiled)
    bp_ref  : (D, 1)      joint_embed conv bias
    bd_ref  : (D, 1)      dif_embed   conv bias
    out_ref : (NB, D, F)  dy = relu(joint branch) + relu(dif branch)
    """
    nb, num_c, _ = x_ref.shape

    # Hoist all loop-invariant loads out of the per-batch unroll.
    sp = sp_ref[...]
    hp = hp_ref[...]
    sdm = sdm_ref[...]
    hd = hd_ref[...]
    wp = wp_ref[...]
    wd = wd_ref[...]
    bp = bp_ref[...]          # (D, 1)
    bd = bd_ref[...]

    # Normalize the whole block at once (eval-mode BN folded to scale/shift).
    x = x_ref[...]                                   # (NB, C, F)
    posn = x * sp[None] + hp[None]                   # joint branch, normalized
    # dif at t==0 is defined as zero -> sdm's zeroed first-frame columns make
    # difn == BN shift there regardless of the shifted values.
    difn = (x - xp_ref[...]) * sdm[None] + hd[None]  # dif branch, normalized

    # NB is capped small (<=8) by the host-side picker, so a static unroll
    # keeps vreg live ranges bounded without a fori_loop.
    for b in range(nb):
        ep = bp                                      # (D, 1) -> broadcasts to (D, F)
        ed = bd
        for c in range(num_c):   # C == 2: keep the contraction on the VPU, not MXU
            ep = ep + wp[:, c:c + 1] * posn[b, c:c + 1, :]
            ed = ed + wd[:, c:c + 1] * difn[b, c:c + 1, :]
        out_ref[b] = jnp.maximum(ep, 0.0) + jnp.maximum(ed, 0.0)


def _device_info():
    """(tensorcores_per_chip, vmem_budget_bytes) — conservative, generation-aware."""
    try:
        kind = jax.devices()[0].device_kind.lower()
    except Exception:
        kind = ""
    if "v5 lite" in kind or "v5e" in kind or "v5litepod" in kind:
        return 1, 12 << 20          # stay under v5e's 16 MiB default scoped VMEM
    if "v6" in kind:
        return 1, 24 << 20          # single TC, 32 MiB default scoped limit
    if "7" in kind:
        return 2, 16 << 20          # v7x: 2 TCs, params replicated per TC
    return 1, 12 << 20              # unknown backend: be conservative


def _pick_block_batch(N, C, D, F, itemsize=4):
    """Largest block batch (capped at 8 to bound the static unroll) whose
    double-buffered per-step footprint — including the resident weight/bias
    blocks — fits the generation-aware VMEM budget, while keeping at least one
    grid step per TensorCore on multi-TC parts."""
    n_tc, vmem_budget = _device_info()
    param_bytes = (4 * C * F + 2 * D * C + 2 * D) * itemsize
    best = 1
    for nb in range(1, min(N, 8) + 1):
        if N % nb:
            continue
        if n_tc > 1 and N >= n_tc and (N // nb) < n_tc:
            continue                                  # keep >=1 step per TC (v7x)
        step_bytes = 2 * nb * (2 * C + D) * F * itemsize + 2 * param_bytes
        if step_bytes > vmem_budget:
            continue
        best = nb
    return best


def embed_dy(x, params):
    """x: (N, C, T, V) float32 -> (features: (N, D, T*V), dy: (N, D, T, V))."""
    N, C, T, V = x.shape
    sp, hp, sd, hd, wp, bp, wd, bd = params
    D = wp.shape[0]
    F = T * V

    # Lane-dense flat layout; reshape is free (no transpose / HBM round trip).
    x_flat = x.reshape(N, C, F)                               # f = t*V + v
    # Previous-frame copy (zero at t==0) for the temporal difference.
    x_prev = jnp.concatenate(
        [jnp.zeros((N, C, V), x.dtype), x_flat[:, :, : F - V]], axis=-1)

    # Tile only the tiny per-(c,v) BN scale/shift over T (a few KB); the conv
    # weights/biases stay untiled.
    sp_f = jnp.tile(sp, (1, T))                               # (C, F)
    hp_f = jnp.tile(hp, (1, T))
    sd_f = jnp.tile(sd, (1, T))
    hd_f = jnp.tile(hd, (1, T))
    # dif at t==0 is defined as zero -> zero the first-frame scale columns so
    # only the BN shift (then the conv bias path) contributes there.
    tmask = (jnp.arange(F) >= V).astype(sd_f.dtype)
    sdm_f = sd_f * tmask[None, :]

    bp2 = bp[:, None]                                         # (D, 1)
    bd2 = bd[:, None]

    NB = _pick_block_batch(N, C, D, F)
    grid = (N // NB,)

    dy_flat = pl.pallas_call(
        _embed_dy_kernel,
        out_shape=jax.ShapeDtypeStruct((N, D, F), jnp.float32),
        grid=grid,
        in_specs=[
            pl.BlockSpec((NB, C, F), lambda n: (n, 0, 0)),    # x
            pl.BlockSpec((NB, C, F), lambda n: (n, 0, 0)),    # x_prev
            pl.BlockSpec((C, F), lambda n: (0, 0)),           # sp (resident)
            pl.BlockSpec((C, F), lambda n: (0, 0)),           # hp
            pl.BlockSpec((C, F), lambda n: (0, 0)),           # sd (masked)
            pl.BlockSpec((C, F), lambda n: (0, 0)),           # hd
            pl.BlockSpec((D, C), lambda n: (0, 0)),           # wp
            pl.BlockSpec((D, C), lambda n: (0, 0)),           # wd
            pl.BlockSpec((D, 1), lambda n: (0, 0)),           # bp
            pl.BlockSpec((D, 1), lambda n: (0, 0)),           # bd
        ],
        out_specs=pl.BlockSpec((NB, D, F), lambda n: (n, 0, 0)),
        compiler_params=pltpu.CompilerParams(dimension_semantics=("parallel",)),
    )(x_flat, x_prev, sp_f, hp_f, sdm_f, hd_f, wp, wd, bp2, bd2)

    # TODO(synk): SpatialGraphConv / SepTemporal_Block / XPM / adjGraph are not
    # defined in the provided source, so sgcn1->tcn11->tcn12->sgcn2->tcn21->tcn22
    # are not implemented; features are taken from the embedding-stage output dy.
    features = dy_flat                                        # (N, D, T*V) lane-dense
    dy = dy_flat.reshape(N, D, T, V)                          # free reshape
    return features, dy


def make_params(key, C=2, D=D_EMBED, V=V_JOINTS):
    """Eval-mode params matching init_param() (conv: kaiming fan_out, bias 0;
    BN: weight 1, bias 0) plus non-trivial running stats so the BN scale/shift
    path is actually exercised."""
    k_wp, k_wd, k_mp, k_vp, k_md, k_vd = jax.random.split(key, 6)
    gain = math.sqrt(2.0 / (1.0 + 0.01 ** 2))                 # kaiming_normal_, leaky_relu
    std = gain / math.sqrt(D)                                 # fan_out = D * 1 * 1
    wp = std * jax.random.normal(k_wp, (D, C), jnp.float32)
    wd = std * jax.random.normal(k_wd, (D, C), jnp.float32)
    bp = jnp.zeros((D,), jnp.float32)
    bd = jnp.zeros((D,), jnp.float32)

    def bn(k_mean, k_var):
        mean = 0.1 * jax.random.normal(k_mean, (C, V), jnp.float32)
        var = jax.random.uniform(k_var, (C, V), jnp.float32, minval=0.5, maxval=1.5)
        weight = jnp.ones((C, V), jnp.float32)
        bias = jnp.zeros((C, V), jnp.float32)
        scale = weight / jnp.sqrt(var + BN_EPS)
        shift = bias - mean * scale
        return scale, shift

    sp, hp = bn(k_mp, k_vp)
    sd, hd = bn(k_md, k_vd)
    return sp, hp, sd, hd, wp, bp, wd, bd


def _reference(x, params):
    """Pure-JAX reference of the fused embed stage (exact f32 contraction)."""
    sp, hp, sd, hd, wp, bp, wd, bd = params
    pos = jnp.transpose(x, (0, 1, 3, 2))                      # (N, C, V, T)
    dif = pos[..., 1:] - pos[..., :-1]
    dif = jnp.concatenate([jnp.zeros(pos.shape[:-1] + (1,), pos.dtype), dif], -1)
    posn = pos * sp[None, :, :, None] + hp[None, :, :, None]
    difn = dif * sd[None, :, :, None] + hd[None, :, :, None]
    ep = (wp[None, :, :, None, None] * posn[:, None]).sum(2) + bp[None, :, None, None]
    ed = (wd[None, :, :, None, None] * difn[:, None]).sum(2) + bd[None, :, None, None]
    dy = jnp.maximum(ep, 0.0) + jnp.maximum(ed, 0.0)          # (N, D, V, T)
    return jnp.transpose(dy, (0, 1, 3, 2))                    # (N, D, T, V)


if __name__ == "__main__":
    key = jax.random.PRNGKey(0)
    k_x, k_p = jax.random.split(key)

    N, C, T, V = 2, 2, 16, V_JOINTS                           # x: (N, C, T, V)
    x = jax.random.normal(k_x, (N, C, T, V), jnp.float32)
    params = make_params(k_p)

    features, dy = jax.jit(embed_dy)(x, params)
    features = jax.block_until_ready(features)
    dy = jax.block_until_ready(dy)

    ref_dy = _reference(x, params)
    assert features.shape == (N, D_EMBED, T * V)
    assert dy.shape == (N, D_EMBED, T, V)
    assert jnp.allclose(dy, ref_dy, atol=1e-5, rtol=1e-5), "dy mismatch vs reference"
    assert jnp.allclose(features, ref_dy.reshape(N, D_EMBED, -1), atol=1e-5, rtol=1e-5)

    print("KERNEL_OK")
</pallas_src>

<mosaic_0001>
module attributes {stable_mosaic.version = 11 : i64} {
  func.func @_embed_dy_kernel(%arg0: i32, %arg1: memref<2x2x400xf32, #tpu.memory_space<vmem>>, %arg2: memref<2x2x400xf32, #tpu.memory_space<vmem>>, %arg3: memref<2x400xf32, #tpu.memory_space<vmem>>, %arg4: memref<2x400xf32, #tpu.memory_space<vmem>>, %arg5: memref<2x400xf32, #tpu.memory_space<vmem>>, %arg6: memref<2x400xf32, #tpu.memory_space<vmem>>, %arg7: memref<48x2xf32, #tpu.memory_space<vmem>>, %arg8: memref<48x2xf32, #tpu.memory_space<vmem>>, %arg9: memref<48x1xf32, #tpu.memory_space<vmem>>, %arg10: memref<48x1xf32, #tpu.memory_space<vmem>>, %arg11: memref<2x48x400xf32, #tpu.memory_space<vmem>>) attributes {dimension_semantics = [#tpu.dimension_semantics<parallel>], iteration_bounds = array<i64: 1>, scalar_prefetch = 0 : i64, scratch_operands = 0 : i64, tpu.core_type = #tpu.core_type<tc>, window_params = [{transform_indices = @transform_0, window_bounds = array<i64: 2, 2, 400>}, {transform_indices = @transform_1, window_bounds = array<i64: 2, 2, 400>}, {pipeline_mode = #tpu.pipeline_mode<synchronous>, transform_indices = @transform_2, window_bounds = array<i64: 2, 400>}, {pipeline_mode = #tpu.pipeline_mode<synchronous>, transform_indices = @transform_3, window_bounds = array<i64: 2, 400>}, {pipeline_mode = #tpu.pipeline_mode<synchronous>, transform_indices = @transform_4, window_bounds = array<i64: 2, 400>}, {pipeline_mode = #tpu.pipeline_mode<synchronous>, transform_indices = @transform_5, window_bounds = array<i64: 2, 400>}, {pipeline_mode = #tpu.pipeline_mode<synchronous>, transform_indices = @transform_6, window_bounds = array<i64: 48, 2>}, {pipeline_mode = #tpu.pipeline_mode<synchronous>, transform_indices = @transform_7, window_bounds = array<i64: 48, 2>}, {pipeline_mode = #tpu.pipeline_mode<synchronous>, transform_indices = @transform_8, window_bounds = array<i64: 48, 1>}, {pipeline_mode = #tpu.pipeline_mode<synchronous>, transform_indices = @transform_9, window_bounds = array<i64: 48, 1>}, {transform_indices = @transform_10, window_bounds = array<i64: 2, 48, 400>}]} {
    %c0 = arith.constant 0 : index
    %c0_0 = arith.constant 0 : index
    %0 = vector.load %arg3[%c0, %c0_0] : memref<2x400xf32, #tpu.memory_space<vmem>>, vector<2x400xf32>
    %c0_1 = arith.constant 0 : index
    %c0_2 = arith.constant 0 : index
    %1 = vector.load %arg4[%c0_1, %c0_2] : memref<2x400xf32, #tpu.memory_space<vmem>>, vector<2x400xf32>
    %c0_3 = arith.constant 0 : index
    %c0_4 = arith.constant 0 : index
    %2 = vector.load %arg5[%c0_3, %c0_4] : memref<2x400xf32, #tpu.memory_space<vmem>>, vector<2x400xf32>
    %c0_5 = arith.constant 0 : index
    %c0_6 = arith.constant 0 : index
    %3 = vector.load %arg6[%c0_5, %c0_6] : memref<2x400xf32, #tpu.memory_space<vmem>>, vector<2x400xf32>
    %c0_7 = arith.constant 0 : index
    %c0_8 = arith.constant 0 : index
    %4 = vector.load %arg7[%c0_7, %c0_8] : memref<48x2xf32, #tpu.memory_space<vmem>>, vector<48x2xf32>
    %c0_9 = arith.constant 0 : index
    %c0_10 = arith.constant 0 : index
    %5 = vector.load %arg8[%c0_9, %c0_10] : memref<48x2xf32, #tpu.memory_space<vmem>>, vector<48x2xf32>
    %c0_11 = arith.constant 0 : index
    %c0_12 = arith.constant 0 : index
    %6 = vector.load %arg9[%c0_11, %c0_12] : memref<48x1xf32, #tpu.memory_space<vmem>>, vector<48x1xf32>
    %c0_13 = arith.constant 0 : index
    %c0_14 = arith.constant 0 : index
    %7 = vector.load %arg10[%c0_13, %c0_14] : memref<48x1xf32, #tpu.memory_space<vmem>>, vector<48x1xf32>
    %c0_15 = arith.constant 0 : index
    %c0_16 = arith.constant 0 : index
    %c0_17 = arith.constant 0 : index
    %8 = vector.load %arg1[%c0_15, %c0_16, %c0_17] : memref<2x2x400xf32, #tpu.memory_space<vmem>>, vector<2x2x400xf32>
    %9 = vector.shape_cast %0 : vector<2x400xf32> to vector<1x2x400xf32>
    %10 = vector.broadcast %9 : vector<1x2x400xf32> to vector<2x2x400xf32>
    %11 = arith.mulf %8, %10 : vector<2x2x400xf32>
    %12 = vector.shape_cast %1 : vector<2x400xf32> to vector<1x2x400xf32>
    %13 = vector.broadcast %12 : vector<1x2x400xf32> to vector<2x2x400xf32>
    %14 = arith.addf %11, %13 : vector<2x2x400xf32>
    %c0_18 = arith.constant 0 : index
    %c0_19 = arith.constant 0 : index
    %c0_20 = arith.constant 0 : index
    %15 = vector.load %arg2[%c0_18, %c0_19, %c0_20] : memref<2x2x400xf32, #tpu.memory_space<vmem>>, vector<2x2x400xf32>
    %16 = arith.subf %8, %15 : vector<2x2x400xf32>
    %17 = vector.shape_cast %2 : vector<2x400xf32> to vector<1x2x400xf32>
    %18 = vector.broadcast %17 : vector<1x2x400xf32> to vector<2x2x400xf32>
    %19 = arith.mulf %16, %18 : vector<2x2x400xf32>
    %20 = vector.shape_cast %3 : vector<2x400xf32> to vector<1x2x400xf32>
    %21 = vector.broadcast %20 : vector<1x2x400xf32> to vector<2x2x400xf32>
    %22 = arith.addf %19, %21 : vector<2x2x400xf32>
    %23 = vector.extract_strided_slice %4 {offsets = [0, 0], sizes = [48, 1], strides = [1, 1]} : vector<48x2xf32> to vector<48x1xf32>
    %24 = vector.extract_strided_slice %14 {offsets = [0, 0, 0], sizes = [1, 1, 400], strides = [1, 1, 1]} : vector<2x2x400xf32> to vector<1x1x400xf32>
    %25 = vector.shape_cast %24 : vector<1x1x400xf32> to vector<1x400xf32>
    %26 = vector.broadcast %23 : vector<48x1xf32> to vector<48x400xf32>
    %27 = vector.broadcast %25 : vector<1x400xf32> to vector<48x400xf32>
    %28 = arith.mulf %26, %27 : vector<48x400xf32>
    %29 = vector.broadcast %6 : vector<48x1xf32> to vector<48x400xf32>
    %30 = arith.addf %29, %28 : vector<48x400xf32>
    %31 = vector.extract_strided_slice %5 {offsets = [0, 0], sizes = [48, 1], strides = [1, 1]} : vector<48x2xf32> to vector<48x1xf32>
    %32 = vector.extract_strided_slice %22 {offsets = [0, 0, 0], sizes = [1, 1, 400], strides = [1, 1, 1]} : vector<2x2x400xf32> to vector<1x1x400xf32>
    %33 = vector.shape_cast %32 : vector<1x1x400xf32> to vector<1x400xf32>
    %34 = vector.broadcast %31 : vector<48x1xf32> to vector<48x400xf32>
    %35 = vector.broadcast %33 : vector<1x400xf32> to vector<48x400xf32>
    %36 = arith.mulf %34, %35 : vector<48x400xf32>
    %37 = vector.broadcast %7 : vector<48x1xf32> to vector<48x400xf32>
    %38 = arith.addf %37, %36 : vector<48x400xf32>
    %39 = vector.extract_strided_slice %4 {offsets = [0, 1], sizes = [48, 1], strides = [1, 1]} : vector<48x2xf32> to vector<48x1xf32>
    %40 = vector.extract_strided_slice %14 {offsets = [0, 1, 0], sizes = [1, 1, 400], strides = [1, 1, 1]} : vector<2x2x400xf32> to vector<1x1x400xf32>
    %41 = vector.shape_cast %40 : vector<1x1x400xf32> to vector<1x400xf32>
    %42 = vector.broadcast %39 : vector<48x1xf32> to vector<48x400xf32>
    %43 = vector.broadcast %41 : vector<1x400xf32> to vector<48x400xf32>
    %44 = arith.mulf %42, %43 : vector<48x400xf32>
    %45 = arith.addf %30, %44 : vector<48x400xf32>
    %46 = vector.extract_strided_slice %5 {offsets = [0, 1], sizes = [48, 1], strides = [1, 1]} : vector<48x2xf32> to vector<48x1xf32>
    %47 = vector.extract_strided_slice %22 {offsets = [0, 1, 0], sizes = [1, 1, 400], strides = [1, 1, 1]} : vector<2x2x400xf32> to vector<1x1x400xf32>
    %48 = vector.shape_cast %47 : vector<1x1x400xf32> to vector<1x400xf32>
    %49 = vector.broadcast %46 : vector<48x1xf32> to vector<48x400xf32>
    %50 = vector.broadcast %48 : vector<1x400xf32> to vector<48x400xf32>
    %51 = arith.mulf %49, %50 : vector<48x400xf32>
    %52 = arith.addf %38, %51 : vector<48x400xf32>
    %cst = arith.constant 0.000000e+00 : f32
    %53 = vector.broadcast %cst : f32 to vector<48x400xf32>
    %54 = arith.maximumf %45, %53 : vector<48x400xf32>
    %cst_21 = arith.constant 0.000000e+00 : f32
    %55 = vector.broadcast %cst_21 : f32 to vector<48x400xf32>
    %56 = arith.maximumf %52, %55 : vector<48x400xf32>
    %57 = arith.addf %54, %56 : vector<48x400xf32>
    %c0_22 = arith.constant 0 : index
    %c0_23 = arith.constant 0 : index
    %c0_24 = arith.constant 0 : index
    %58 = vector.load %arg11[%c0_22, %c0_23, %c0_24] : memref<2x48x400xf32, #tpu.memory_space<vmem>>, vector<1x48x400xf32>
    %59 = vector.shape_cast %58 : vector<1x48x400xf32> to vector<48x400xf32>
    %60 = vector.shape_cast %57 : vector<48x400xf32> to vector<1x48x400xf32>
    tpu.vector_store %arg11[%c0_22, %c0_23, %c0_24], %60 {strides = array<i32>} : memref<2x48x400xf32, #tpu.memory_space<vmem>>, vector<1x48x400xf32>,
    %61 = vector.extract_strided_slice %4 {offsets = [0, 0], sizes = [48, 1], strides = [1, 1]} : vector<48x2xf32> to vector<48x1xf32>
    %62 = vector.extract_strided_slice %14 {offsets = [1, 0, 0], sizes = [1, 1, 400], strides = [1, 1, 1]} : vector<2x2x400xf32> to vector<1x1x400xf32>
    %63 = vector.shape_cast %62 : vector<1x1x400xf32> to vector<1x400xf32>
    %64 = vector.broadcast %61 : vector<48x1xf32> to vector<48x400xf32>
    %65 = vector.broadcast %63 : vector<1x400xf32> to vector<48x400xf32>
    %66 = arith.mulf %64, %65 : vector<48x400xf32>
    %67 = vector.broadcast %6 : vector<48x1xf32> to vector<48x400xf32>
    %68 = arith.addf %67, %66 : vector<48x400xf32>
    %69 = vector.extract_strided_slice %5 {offsets = [0, 0], sizes = [48, 1], strides = [1, 1]} : vector<48x2xf32> to vector<48x1xf32>
    %70 = vector.extract_strided_slice %22 {offsets = [1, 0, 0], sizes = [1, 1, 400], strides = [1, 1, 1]} : vector<2x2x400xf32> to vector<1x1x400xf32>
    %71 = vector.shape_cast %70 : vector<1x1x400xf32> to vector<1x400xf32>
    %72 = vector.broadcast %69 : vector<48x1xf32> to vector<48x400xf32>
    %73 = vector.broadcast %71 : vector<1x400xf32> to vector<48x400xf32>
    %74 = arith.mulf %72, %73 : vector<48x400xf32>
    %75 = vector.broadcast %7 : vector<48x1xf32> to vector<48x400xf32>
    %76 = arith.addf %75, %74 : vector<48x400xf32>
    %77 = vector.extract_strided_slice %4 {offsets = [0, 1], sizes = [48, 1], strides = [1, 1]} : vector<48x2xf32> to vector<48x1xf32>
    %78 = vector.extract_strided_slice %14 {offsets = [1, 1, 0], sizes = [1, 1, 400], strides = [1, 1, 1]} : vector<2x2x400xf32> to vector<1x1x400xf32>
    %79 = vector.shape_cast %78 : vector<1x1x400xf32> to vector<1x400xf32>
    %80 = vector.broadcast %77 : vector<48x1xf32> to vector<48x400xf32>
    %81 = vector.broadcast %79 : vector<1x400xf32> to vector<48x400xf32>
    %82 = arith.mulf %80, %81 : vector<48x400xf32>
    %83 = arith.addf %68, %82 : vector<48x400xf32>
    %84 = vector.extract_strided_slice %5 {offsets = [0, 1], sizes = [48, 1], strides = [1, 1]} : vector<48x2xf32> to vector<48x1xf32>
    %85 = vector.extract_strided_slice %22 {offsets = [1, 1, 0], sizes = [1, 1, 400], strides = [1, 1, 1]} : vector<2x2x400xf32> to vector<1x1x400xf32>
    %86 = vector.shape_cast %85 : vector<1x1x400xf32> to vector<1x400xf32>
    %87 = vector.broadcast %84 : vector<48x1xf32> to vector<48x400xf32>
    %88 = vector.broadcast %86 : vector<1x400xf32> to vector<48x400xf32>
    %89 = arith.mulf %87, %88 : vector<48x400xf32>
    %90 = arith.addf %76, %89 : vector<48x400xf32>
    %cst_25 = arith.constant 0.000000e+00 : f32
    %91 = vector.broadcast %cst_25 : f32 to vector<48x400xf32>
    %92 = arith.maximumf %83, %91 : vector<48x400xf32>
    %cst_26 = arith.constant 0.000000e+00 : f32
    %93 = vector.broadcast %cst_26 : f32 to vector<48x400xf32>
    %94 = arith.maximumf %90, %93 : vector<48x400xf32>
    %95 = arith.addf %92, %94 : vector<48x400xf32>
    %c1 = arith.constant 1 : index
    %c0_27 = arith.constant 0 : index
    %c0_28 = arith.constant 0 : index
    %96 = vector.load %arg11[%c1, %c0_27, %c0_28] : memref<2x48x400xf32, #tpu.memory_space<vmem>>, vector<1x48x400xf32>
    %97 = vector.shape_cast %96 : vector<1x48x400xf32> to vector<48x400xf32>
    %98 = vector.shape_cast %95 : vector<48x400xf32> to vector<1x48x400xf32>
    tpu.vector_store %arg11[%c1, %c0_27, %c0_28], %98 {strides = array<i32>} : memref<2x48x400xf32, #tpu.memory_space<vmem>>, vector<1x48x400xf32>,
    return
  }
  func.func @transform_0(%arg0: i32) -> (i32, i32, i32) {
    %c0_i32 = arith.constant 0 : i32
    %c0_i32_0 = arith.constant 0 : i32
    %c0_i32_1 = arith.constant 0 : i32
    return %arg0, %c0_i32, %c0_i32_0 : i32, i32, i32
  }
  func.func @transform_1(%arg0: i32) -> (i32, i32, i32) {
    %c0_i32 = arith.constant 0 : i32
    %c0_i32_0 = arith.constant 0 : i32
    %c0_i32_1 = arith.constant 0 : i32
    return %arg0, %c0_i32, %c0_i32_0 : i32, i32, i32
  }
  func.func @transform_2(%arg0: i32) -> (i32, i32) {
    %c0_i32 = arith.constant 0 : i32
    %c0_i32_0 = arith.constant 0 : i32
    %c0_i32_1 = arith.constant 0 : i32
    return %c0_i32, %c0_i32_0 : i32, i32
  }
  func.func @transform_3(%arg0: i32) -> (i32, i32) {
    %c0_i32 = arith.constant 0 : i32
    %c0_i32_0 = arith.constant 0 : i32
    %c0_i32_1 = arith.constant 0 : i32
    return %c0_i32, %c0_i32_0 : i32, i32
  }
  func.func @transform_4(%arg0: i32) -> (i32, i32) {
    %c0_i32 = arith.constant 0 : i32
    %c0_i32_0 = arith.constant 0 : i32
    %c0_i32_1 = arith.constant 0 : i32
    return %c0_i32, %c0_i32_0 : i32, i32
  }
  func.func @transform_5(%arg0: i32) -> (i32, i32) {
    %c0_i32 = arith.constant 0 : i32
    %c0_i32_0 = arith.constant 0 : i32
    %c0_i32_1 = arith.constant 0 : i32
    return %c0_i32, %c0_i32_0 : i32, i32
  }
  func.func @transform_6(%arg0: i32) -> (i32, i32) {
    %c0_i32 = arith.constant 0 : i32
    %c0_i32_0 = arith.constant 0 : i32
    %c0_i32_1 = arith.constant 0 : i32
    return %c0_i32, %c0_i32_0 : i32, i32
  }
  func.func @transform_7(%arg0: i32) -> (i32, i32) {
    %c0_i32 = arith.constant 0 : i32
    %c0_i32_0 = arith.constant 0 : i32
    %c0_i32_1 = arith.constant 0 : i32
    return %c0_i32, %c0_i32_0 : i32, i32
  }
  func.func @transform_8(%arg0: i32) -> (i32, i32) {
    %c0_i32 = arith.constant 0 : i32
    %c0_i32_0 = arith.constant 0 : i32
    %c0_i32_1 = arith.constant 0 : i32
    return %c0_i32, %c0_i32_0 : i32, i32
  }
  func.func @transform_9(%arg0: i32) -> (i32, i32) {
    %c0_i32 = arith.constant 0 : i32
    %c0_i32_0 = arith.constant 0 : i32
    %c0_i32_1 = arith.constant 0 : i32
    return %c0_i32, %c0_i32_0 : i32, i32
  }
  func.func @transform_10(%arg0: i32) -> (i32, i32, i32) {
    %c0_i32 = arith.constant 0 : i32
    %c0_i32_0 = arith.constant 0 : i32
    %c0_i32_1 = arith.constant 0 : i32
    return %arg0, %c0_i32, %c0_i32_0 : i32, i32, i32
  }
}

</mosaic_0001>

<llo_original>
// kernel: tile.24
$region0: #{tile.24}
  %s0 = inlined_call_operand.vmem [shape: f32[2,16,25], index: 0, kind: input, shape index: {}]
  %s1 = inlined_call_operand.vmem [shape: f32[2,400], index: 1, kind: output, shape index: {}]
  $region1: #{tile.24} parent=0
    #allocation0 [shape = 'u8[16384]{0}', space=vmem, size = 0x4000, scoped, tag = 'scoped mem for output reshape']
    %s2 = smov 3
    %v3 = vld [vmem:[%s0] ss:$16 sm:%s2]
    %vm4 = vcmask 203776
    %5 = vst.msk [vmem:[#allocation0] sm:$0x3] %vm4, %v3
    %s6 = scalar_lea.vmem %s0, 5
    %s7 = smov 3
    %v8 = vld [vmem:[%s6] ss:$16 sm:%s7]
    %s9 = scalar_lea.vmem %s0, 5
    %s10 = smov 3
    %v11 = vld [vmem:[%s9] ss:$16 sm:%s10]
    %vm12 = vcmask 23552
    %v13 = vsel %vm12, %v11, %v8
    %14 = vrot.lane.b32.xlu0 %v13, 125
    %v15 = vpop.permute.xlu0 %14
    %vm16 = vcmask 179200
    %s17 = scalar_lea.vmem [#allocation0], 8
    %18 = vst.msk [vmem:[%s17] sm:$0x3] %vm16, %v15
    %vm19 = vcmask 1048552
    %20 = vst.msk [vmem:[#allocation0] sm:$0x3] %vm19, %v15
    %s21 = scalar_lea.vmem %s0, 10
    %s22 = smov 3
    %v23 = vld [vmem:[%s21] ss:$16 sm:%s22]
    %s24 = scalar_lea.vmem %s0, 10
    %s25 = smov 3
    %v26 = vld [vmem:[%s24] ss:$16 sm:%s25]
    %vm27 = vcmask 48128
    %v28 = vsel %vm27, %v26, %v23
    %29 = vrot.lane.b32.xlu0 %v28, 122
    %v30 = vpop.permute.xlu0 %29
    %vm31 = vcmask 154624
    %s32 = scalar_lea.vmem [#allocation0], 16
    %33 = vst.msk [vmem:[%s32] sm:$0x3] %vm31, %v30
    %vm34 = vcmask 1048528
    %s35 = scalar_lea.vmem [#allocation0], 8
    %36 = vst.msk [vmem:[%s35] sm:$0x3] %vm34, %v30
    %s37 = scalar_lea.vmem %s0, 15
    %s38 = smov 3
    %v39 = vld [vmem:[%s37] ss:$16 sm:%s38]
    %s40 = scalar_lea.vmem %s0, 15
    %s41 = smov 3
    %v42 = vld [vmem:[%s40] ss:$16 sm:%s41]
    %vm43 = vcmask 72704
    %v44 = vsel %vm43, %v42, %v39
    %45 = vrot.lane.b32.xlu0 %v44, 119
    %v46 = vpop.permute.xlu0 %45
    %vm47 = vcmask 130048
    %s48 = scalar_lea.vmem [#allocation0], 24
    %49 = vst.msk [vmem:[%s48] sm:$0x3] %vm47, %v46
    %vm50 = vcmask 1048504
    %s51 = scalar_lea.vmem [#allocation0], 16
    %52 = vst.msk [vmem:[%s51] sm:$0x3] %vm50, %v46
    %s53 = scalar_lea.vmem %s0, 4
    %s54 = smov 3
    %v55 = vld [vmem:[%s53] ss:$16 sm:%s54]
    %56 = vrot.lane.b32.xlu0 %v55, 100
    %v57 = vpop.permute.xlu0 %56
    %vm58 = vcmask 1023776
    %59 = vst.msk [vmem:[#allocation0] sm:$0x3] %vm58, %v57
    %s60 = scalar_lea.vmem %s0, 9
    %s61 = smov 3
    %v62 = vld [vmem:[%s60] ss:$16 sm:%s61]
    %63 = vrot.lane.b32.xlu0 %v62, 97
    %v64 = vpop.permute.xlu0 %63
    %vm65 = vcmask 999176
    %s66 = scalar_lea.vmem [#allocation0], 8
    %67 = vst.msk [vmem:[%s66] sm:$0x3] %vm65, %v64
    %s68 = scalar_lea.vmem %s0, 14
    %s69 = smov 3
    %v70 = vld [vmem:[%s68] ss:$16 sm:%s69]
    %71 = vrot.lane.b32.xlu0 %v70, 94
    %v72 = vpop.permute.xlu0 %71
    %vm73 = vcmask 974576
    %s74 = scalar_lea.vmem [#allocation0], 16
    %75 = vst.msk [vmem:[%s74] sm:$0x3] %vm73, %v72
    %s76 = scalar_lea.vmem %s0, 3
    %s77 = smov 3
    %v78 = vld [vmem:[%s76] ss:$16 sm:%s77]
    %79 = vrot.lane.b32.xlu0 %v78, 75
    %v80 = vpop.permute.xlu0 %79
    %vm81 = vcmask 818776
    %82 = vst.msk [vmem:[#allocation0] sm:$0x3] %vm81, %v80
    %s83 = scalar_lea.vmem %s0, 8
    %s84 = smov 3
    %v85 = vld [vmem:[%s83] ss:$16 sm:%s84]
    %86 = vrot.lane.b32.xlu0 %v85, 72
    %v87 = vpop.permute.xlu0 %86
    %vm88 = vcmask 794176
    %s89 = scalar_lea.vmem [#allocation0], 8
    %90 = vst.msk [vmem:[%s89] sm:$0x3] %vm88, %v87
    %s91 = scalar_lea.vmem %s0, 13
    %s92 = smov 3
    %v93 = vld [vmem:[%s91] ss:$16 sm:%s92]
    %94 = vrot.lane.b32.xlu0 %v93, 69
    %v95 = vpop.permute.xlu0 %94
    %vm96 = vcmask 769576
    %s97 = scalar_lea.vmem [#allocation0], 16
    %98 = vst.msk [vmem:[%s97] sm:$0x3] %vm96, %v95
    %s99 = scalar_lea.vmem %s0, 2
    %s100 = smov 3
    %v101 = vld [vmem:[%s99] ss:$16 sm:%s100]
    %102 = vrot.lane.b32.xlu0 %v101, 50
    %v103 = vpop.permute.xlu0 %102
    %vm104 = vcmask 613776
    %105 = vst.msk [vmem:[#allocation0] sm:$0x3] %vm104, %v103
    %s106 = scalar_lea.vmem %s0, 7
    %s107 = smov 3
    %v108 = vld [vmem:[%s106] ss:$16 sm:%s107]
    %109 = vrot.lane.b32.xlu0 %v108, 47
    %v110 = vpop.permute.xlu0 %109
    %vm111 = vcmask 589176
    %s112 = scalar_lea.vmem [#allocation0], 8
    %113 = vst.msk [vmem:[%s112] sm:$0x3] %vm111, %v110
    %s114 = scalar_lea.vmem %s0, 12
    %s115 = smov 3
    %v116 = vld [vmem:[%s114] ss:$16 sm:%s115]
    %117 = vrot.lane.b32.xlu0 %v116, 44
    %v118 = vpop.permute.xlu0 %117
    %vm119 = vcmask 564576
    %s120 = scalar_lea.vmem [#allocation0], 16
    %121 = vst.msk [vmem:[%s120] sm:$0x3] %vm119, %v118
    %s122 = scalar_lea.vmem %s0, 1
    %s123 = smov 3
    %v124 = vld [vmem:[%s122] ss:$16 sm:%s123]
    %125 = vrot.lane.b32.xlu0 %v124, 25
    %v126 = vpop.permute.xlu0 %125
    %vm127 = vcmask 408776
    %128 = vst.msk [vmem:[#allocation0] sm:$0x3] %vm127, %v126
    %s129 = scalar_lea.vmem %s0, 6
    %s130 = smov 3
    %v131 = vld [vmem:[%s129] ss:$16 sm:%s130]
    %132 = vrot.lane.b32.xlu0 %v131, 22
    %v133 = vpop.permute.xlu0 %132
    %vm134 = vcmask 384176
    %s135 = scalar_lea.vmem [#allocation0], 8
    %136 = vst.msk [vmem:[%s135] sm:$0x3] %vm134, %v133
    %s137 = scalar_lea.vmem %s0, 11
    %s138 = smov 3
    %v139 = vld [vmem:[%s137] ss:$16 sm:%s138]
    %140 = vrot.lane.b32.xlu0 %v139, 19
    %v141 = vpop.permute.xlu0 %140
    %vm142 = vcmask 359576
    %s143 = scalar_lea.vmem [#allocation0], 16
    %144 = vst.msk [vmem:[%s143] sm:$0x3] %vm142, %v141
    %s146 = ssub.s32 4, 1
    %v147 = vld [vmem:[#allocation0] sm:%s146]
    %s149 = ssub.s32 4, 1
    %150 = vst [vmem:[%s1] sm:%s149] %v147
    %s151 = scalar_lea.vmem [#allocation0], 8
    %v152 = vld [vmem:[%s151] sm:%s146]
    %s154 = ssub.s32 4, 1
    %s155 = scalar_lea.vmem %s1, 2
    %156 = vst [vmem:[%s155] sm:%s154] %v152
    %s157 = scalar_lea.vmem [#allocation0], 16
    %v158 = vld [vmem:[%s157] sm:%s146]
    %s160 = ssub.s32 4, 1
    %s161 = scalar_lea.vmem %s1, 4
    %162 = vst [vmem:[%s161] sm:%s160] %v158
    %s163 = scalar_lea.vmem [#allocation0], 24
    %v164 = vld [vmem:[%s163] sm:%s146]
    %s166 = ssub.s32 4, 1
    %s167 = scalar_lea.vmem %s1, 6
    %168 = vst [vmem:[%s167] sm:%s166] %v164

// kernel: embed_dy.1
$region0: #{embed_dy.1}
  #allocation0 [shape = 'u32[]', space=smem, size = 0x4, offset = 0x4, fixed_abs, tag = 'smem constant byte address 0x4 - core index']
  #allocation1 [shape = 'u32[72,128]{1,0:T(1,128)}', space=vmem, size = 0x9000, scoped, tag = 'internal scratch']
  %s0 = inlined_call_operand.vmem [shape: f32[2,2,400], index: 0, kind: input, shape index: {}]
  %s1 = inlined_call_operand.vmem [shape: f32[2,2,400], index: 1, kind: input, shape index: {}]
  %s2 = inlined_call_operand.vmem [shape: f32[2,400], index: 2, kind: input, shape index: {}]
  %s3 = inlined_call_operand.vmem [shape: f32[2,400], index: 3, kind: input, shape index: {}]
  %s4 = inlined_call_operand.vmem [shape: f32[2,400], index: 4, kind: input, shape index: {}]
  %s5 = inlined_call_operand.vmem [shape: f32[2,400], index: 5, kind: input, shape index: {}]
  %s6 = inlined_call_operand.vmem [shape: f32[48,2], index: 6, kind: input, shape index: {}]
  %s7 = inlined_call_operand.vmem [shape: f32[48,2], index: 7, kind: input, shape index: {}]
  %s8 = inlined_call_operand.vmem [shape: f32[48,1], index: 8, kind: input, shape index: {}]
  %s9 = inlined_call_operand.vmem [shape: f32[48,1], index: 9, kind: input, shape index: {}]
  %s10 = inlined_call_operand.vmem [shape: f32[2,48,400], index: 10, kind: output, shape index: {}]
  %s11 = sld [smem:[#allocation0]]
  $region50: #{embed_dy.1} parent=0
    _
  %s13 = ssub.s32 1, %s11
  %s14 = scalar_select 0, %s13, %s11
  // Predicated region
  $region2: #{embed_dy.1} parent=0 // pred_check
    _
  $region3: #{embed_dy.1} parent=0 // pred_check_branch
    %16 = sbr.rel (0) target = $region5
  $region4: #{embed_dy.1} parent=0 // pred_region
    _
  $region5: #{embed_dy.1} parent=0 // pred_fallthru
    _
  // Predicated region
  $region6: #{embed_dy.1} parent=0 // pred_check
    _
  $region7: #{embed_dy.1} parent=0 // pred_check_branch
    %18 = sbr.rel (0) target = $region9
  $region8: #{embed_dy.1} parent=0 // pred_region
    _
  $region9: #{embed_dy.1} parent=0 // pred_fallthru
    _
  // Predicated region
  $region10: #{embed_dy.1} parent=0 // pred_check
    _
  $region11: #{embed_dy.1} parent=0 // pred_check_branch
    %20 = sbr.rel (0) target = $region13
  $region12: #{embed_dy.1} parent=0 // pred_region
    _
  $region13: #{embed_dy.1} parent=0 // pred_fallthru
    _
  // Predicated region
  $region14: #{embed_dy.1} parent=0 // pred_check
    _
  $region15: #{embed_dy.1} parent=0 // pred_check_branch
    %22 = sbr.rel (0) target = $region17
  $region16: #{embed_dy.1} parent=0 // pred_region
    _
  $region17: #{embed_dy.1} parent=0 // pred_fallthru
    _
  // Predicated region
  $region18: #{embed_dy.1} parent=0 // pred_check
    _
  $region19: #{embed_dy.1} parent=0 // pred_check_branch
    %24 = sbr.rel (0) target = $region21
  $region20: #{embed_dy.1} parent=0 // pred_region
    _
  $region21: #{embed_dy.1} parent=0 // pred_fallthru
    _
  // Predicated region
  $region22: #{embed_dy.1} parent=0 // pred_check
    _
  $region23: #{embed_dy.1} parent=0 // pred_check_branch
    %26 = sbr.rel (0) target = $region25
  $region24: #{embed_dy.1} parent=0 // pred_region
    _
  $region25: #{embed_dy.1} parent=0 // pred_fallthru
    _
  // Predicated region
  $region26: #{embed_dy.1} parent=0 // pred_check
    _
  $region27: #{embed_dy.1} parent=0 // pred_check_branch
    %28 = sbr.rel (0) target = $region29
  $region28: #{embed_dy.1} parent=0 // pred_region
    _
  $region29: #{embed_dy.1} parent=0 // pred_fallthru
    _
  // Predicated region
  $region30: #{embed_dy.1} parent=0 // pred_check
    _
  $region31: #{embed_dy.1} parent=0 // pred_check_branch
    %30 = sbr.rel (0) target = $region33
  $region32: #{embed_dy.1} parent=0 // pred_region
    _
  $region33: #{embed_dy.1} parent=0 // pred_fallthru
    _
  // Predicated region
  $region34: #{embed_dy.1} parent=0 // pred_check
    _
  $region35: #{embed_dy.1} parent=0 // pred_check_branch
    %32 = sbr.rel (0) target = $region37
  $region36: #{embed_dy.1} parent=0 // pred_region
    _
  $region37: #{embed_dy.1} parent=0 // pred_fallthru
    _
  // Predicated region
  $region38: #{embed_dy.1} parent=0 // pred_check
    _
  $region39: #{embed_dy.1} parent=0 // pred_check_branch
    %34 = sbr.rel (0) target = $region41
  $region40: #{embed_dy.1} parent=0 // pred_region
    _
  $region41: #{embed_dy.1} parent=0 // pred_fallthru
    _
  %v35 = vld [vmem:[%s2] sm:$0xff]
  %v36 = vld [vmem:[%s3] sm:$0xff]
  %v37 = vld [vmem:[%s4] sm:$0xff]
  %v38 = vld [vmem:[%s5] sm:$0xff]
  %v39 = vld [vmem:[%s6] sm:$0xff]
  %v40 = vld [vmem:[%s6 + $0x8] sm:$0xff]
  %v41 = vld [vmem:[%s6 + $0x10] sm:$0xff]
  %v42 = vld [vmem:[%s6 + $0x18] sm:$0xff]
  %v43 = vld [vmem:[%s6 + $0x20] sm:$0xff]
  %v44 = vld [vmem:[%s6 + $0x28] sm:$0xff]
  %v45 = vld [vmem:[%s7] sm:$0xff]
  %v46 = vld [vmem:[%s7 + $0x8] sm:$0xff]
  %v47 = vld [vmem:[%s7 + $0x10] sm:$0xff]
  %v48 = vld [vmem:[%s7 + $0x18] sm:$0xff]
  %v49 = vld [vmem:[%s7 + $0x20] sm:$0xff]
  %v50 = vld [vmem:[%s7 + $0x28] sm:$0xff]
  %v51 = vld [vmem:[%s8] sm:$0xff]
  %v52 = vld [vmem:[%s8 + $0x8] sm:$0xff]
  %v53 = vld [vmem:[%s8 + $0x10] sm:$0xff]
  %v54 = vld [vmem:[%s8 + $0x18] sm:$0xff]
  %v55 = vld [vmem:[%s8 + $0x20] sm:$0xff]
  %v56 = vld [vmem:[%s8 + $0x28] sm:$0xff]
  %v57 = vld [vmem:[%s9] sm:$0xff]
  %v58 = vld [vmem:[%s9 + $0x8] sm:$0xff]
  %v59 = vld [vmem:[%s9 + $0x10] sm:$0xff]
  %v60 = vld [vmem:[%s9 + $0x18] sm:$0xff]
  %v61 = vld [vmem:[%s9 + $0x20] sm:$0xff]
  %v62 = vld [vmem:[%s9 + $0x28] sm:$0xff]
  %v63 = vld [vmem:[%s0] sm:$0xff]
  %v64 = vld [vmem:[%s0 + $0x8] sm:$0xff]
  %v65 = vmul.f32 %v63, %v35
  %v66 = vmul.f32 %v64, %v35
  %v67 = vadd.f32 %v65, %v36
  %v68 = vadd.f32 %v66, %v36
  %v69 = vld [vmem:[%s1] sm:$0xff]
  %v70 = vld [vmem:[%s1 + $0x8] sm:$0xff]
  %v71 = vsub.f32 %v63, %v69
  %v72 = vsub.f32 %v64, %v70
  %v73 = vmul.f32 %v71, %v37
  %v74 = vmul.f32 %v72, %v37
  %v75 = vadd.f32 %v73, %v38
  %v76 = vadd.f32 %v74, %v38
  %78 = vset.pattern.permute.xlu0 0
  %79 = vperm.xlu0 %78, %v39
  %v80 = vpop.permute.xlu0 %79
  %83 = vset.pattern.permute.xlu0 0
  %84 = vperm.xlu0 %83, %v40
  %v85 = vpop.permute.xlu0 %84
  %88 = vset.pattern.permute.xlu0 0
  %89 = vperm.xlu0 %88, %v41
  %v90 = vpop.permute.xlu0 %89
  %93 = vset.pattern.permute.xlu0 0
  %94 = vperm.xlu0 %93, %v42
  %v95 = vpop.permute.xlu0 %94
  %98 = vset.pattern.permute.xlu0 0
  %99 = vperm.xlu0 %98, %v43
  %v100 = vpop.permute.xlu0 %99
  %103 = vset.pattern.permute.xlu0 0
  %104 = vperm.xlu0 %103, %v44
  %v105 = vpop.permute.xlu0 %104
  %v108 = vperm.slane %v67, 0
  %v109 = vperm.slane %v67, 2
  %v110 = vperm.slane %v67, 4
  %v111 = vperm.slane %v67, 6
  %v116 = vperm.slane %v108, 0
  %v117 = vperm.slane %v109, 0
  %v118 = vperm.slane %v110, 0
  %v119 = vperm.slane %v111, 0
  %v120 = vmul.f32 %v80, %v116
  %v121 = vmul.f32 %v80, %v117
  %v122 = vmul.f32 %v80, %v118
  %v123 = vmul.f32 %v80, %v119
  %v124 = vmul.f32 %v85, %v116
  %v125 = vmul.f32 %v85, %v117
  %v126 = vmul.f32 %v85, %v118
  %v127 = vmul.f32 %v85, %v119
  %v128 = vmul.f32 %v90, %v116
  %v129 = vmul.f32 %v90, %v117
  %v130 = vmul.f32 %v90, %v118
  %v131 = vmul.f32 %v90, %v119
  %v132 = vmul.f32 %v95, %v116
  %v133 = vmul.f32 %v95, %v117
  %v134 = vmul.f32 %v95, %v118
  %v135 = vmul.f32 %v95, %v119
  %v136 = vmul.f32 %v100, %v116
  %v137 = vmul.f32 %v100, %v117
  %v138 = vmul.f32 %v100, %v118
  %v139 = vmul.f32 %v100, %v119
  %v140 = vmul.f32 %v105, %v116
  %v141 = vmul.f32 %v105, %v117
  %v142 = vmul.f32 %v105, %v118
  %v143 = vmul.f32 %v105, %v119
  %145 = vset.pattern.permute.xlu0 0
  %146 = vperm.xlu0 %145, %v51
  %v147 = vpop.permute.xlu0 %146
  %150 = vset.pattern.permute.xlu0 0
  %151 = vperm.xlu0 %150, %v52
  %v152 = vpop.permute.xlu0 %151
  %155 = vset.pattern.permute.xlu0 0
  %156 = vperm.xlu0 %155, %v53
  %v157 = vpop.permute.xlu0 %156
  %160 = vset.pattern.permute.xlu0 0
  %161 = vperm.xlu0 %160, %v54
  %v162 = vpop.permute.xlu0 %161
  %165 = vset.pattern.permute.xlu0 0
  %166 = vperm.xlu0 %165, %v55
  %v167 = vpop.permute.xlu0 %166
  %170 = vset.pattern.permute.xlu0 0
  %171 = vperm.xlu0 %170, %v56
  %v172 = vpop.permute.xlu0 %171
  %v174 = vadd.f32 %v147, %v120
  %v175 = vadd.f32 %v147, %v121
  %v176 = vadd.f32 %v147, %v122
  %v177 = vadd.f32 %v147, %v123
  %v178 = vadd.f32 %v152, %v124
  %v179 = vadd.f32 %v152, %v125
  %v180 = vadd.f32 %v152, %v126
  %v181 = vadd.f32 %v152, %v127
  %v182 = vadd.f32 %v157, %v128
  %v183 = vadd.f32 %v157, %v129
  %v184 = vadd.f32 %v157, %v130
  %v185 = vadd.f32 %v157, %v131
  %v186 = vadd.f32 %v162, %v132
  %v187 = vadd.f32 %v162, %v133
  %v188 = vadd.f32 %v162, %v134
  %v189 = vadd.f32 %v162, %v135
  %v190 = vadd.f32 %v167, %v136
  %v191 = vadd.f32 %v167, %v137
  %v192 = vadd.f32 %v167, %v138
  %v193 = vadd.f32 %v167, %v139
  %v194 = vadd.f32 %v172, %v140
  %v195 = vadd.f32 %v172, %v141
  %v196 = vadd.f32 %v172, %v142
  %v197 = vadd.f32 %v172, %v143
  %199 = vset.pattern.permute.xlu0 0
  %200 = vperm.xlu0 %199, %v45
  %v201 = vpop.permute.xlu0 %200
  %204 = vset.pattern.permute.xlu0 0
  %205 = vperm.xlu0 %204, %v46
  %v206 = vpop.permute.xlu0 %205
  %209 = vset.pattern.permute.xlu0 0
  %210 = vperm.xlu0 %209, %v47
  %v211 = vpop.permute.xlu0 %210
  %214 = vset.pattern.permute.xlu0 0
  %215 = vperm.xlu0 %214, %v48
  %v216 = vpop.permute.xlu0 %215
  %219 = vset.pattern.permute.xlu0 0
  %220 = vperm.xlu0 %219, %v49
  %v221 = vpop.permute.xlu0 %220
  %224 = vset.pattern.permute.xlu0 0
  %225 = vperm.xlu0 %224, %v50
  %v226 = vpop.permute.xlu0 %225
  %v229 = vperm.slane %v75, 0
  %v230 = vperm.slane %v75, 2
  %v231 = vperm.slane %v75, 4
  %v232 = vperm.slane %v75, 6
  %v237 = vperm.slane %v229, 0
  %v238 = vperm.slane %v230, 0
  %v239 = vperm.slane %v231, 0
  %v240 = vperm.slane %v232, 0
  %v241 = vmul.f32 %v201, %v237
  %v242 = vmul.f32 %v201, %v238
  %v243 = vmul.f32 %v201, %v239
  %v244 = vmul.f32 %v201, %v240
  %v245 = vmul.f32 %v206, %v237
  %v246 = vmul.f32 %v206, %v238
  %v247 = vmul.f32 %v206, %v239
  %v248 = vmul.f32 %v206, %v240
  %v249 = vmul.f32 %v211, %v237
  %v250 = vmul.f32 %v211, %v238
  %v251 = vmul.f32 %v211, %v239
  %v252 = vmul.f32 %v211, %v240
  %v253 = vmul.f32 %v216, %v237
  %v254 = vmul.f32 %v216, %v238
  %v255 = vmul.f32 %v216, %v239
  %v256 = vmul.f32 %v216, %v240
  %v257 = vmul.f32 %v221, %v237
  %v258 = vmul.f32 %v221, %v238
  %v259 = vmul.f32 %v221, %v239
  %v260 = vmul.f32 %v221, %v240
  %v261 = vmul.f32 %v226, %v237
  %v262 = vmul.f32 %v226, %v238
  %v263 = vmul.f32 %v226, %v239
  %v264 = vmul.f32 %v226, %v240
  %266 = vset.pattern.permute.xlu0 0
  %267 = vperm.xlu0 %266, %v57
  %v268 = vpop.permute.xlu0 %267
  %271 = vset.pattern.permute.xlu0 0
  %272 = vperm.xlu0 %271, %v58
  %v273 = vpop.permute.xlu0 %272
  %276 = vset.pattern.permute.xlu0 0
  %277 = vperm.xlu0 %276, %v59
  %v278 = vpop.permute.xlu0 %277
  %281 = vset.pattern.permute.xlu0 0
  %282 = vperm.xlu0 %281, %v60
  %v283 = vpop.permute.xlu0 %282
  %286 = vset.pattern.permute.xlu0 0
  %287 = vperm.xlu0 %286, %v61
  %v288 = vpop.permute.xlu0 %287
  %291 = vset.pattern.permute.xlu0 0
  %292 = vperm.xlu0 %291, %v62
  %v293 = vpop.permute.xlu0 %292
  %v295 = vadd.f32 %v268, %v241
  %v296 = vadd.f32 %v268, %v242
  %v297 = vadd.f32 %v268, %v243
  %v298 = vadd.f32 %v268, %v244
  %v299 = vadd.f32 %v273, %v245
  %v300 = vadd.f32 %v273, %v246
  %v301 = vadd.f32 %v273, %v247
  %v302 = vadd.f32 %v273, %v248
  %v303 = vadd.f32 %v278, %v249
  %v304 = vadd.f32 %v278, %v250
  %v305 = vadd.f32 %v278, %v251
  %v306 = vadd.f32 %v278, %v252
  %v307 = vadd.f32 %v283, %v253
  %v308 = vadd.f32 %v283, %v254
  %v309 = vadd.f32 %v283, %v255
  %v310 = vadd.f32 %v283, %v256
  %v311 = vadd.f32 %v288, %v257
  %v312 = vadd.f32 %v288, %v258
  %v313 = vadd.f32 %v288, %v259
  %v314 = vadd.f32 %v288, %v260
  %v315 = vadd.f32 %v293, %v261
  %v316 = vadd.f32 %v293, %v262
  %v317 = vadd.f32 %v293, %v263
  %v318 = vadd.f32 %v293, %v264
  %319 = vset.pattern.permute.xlu0 1
  %320 = vperm.xlu0 %319, %v39
  %v321 = vpop.permute.xlu0 %320
  %323 = vset.pattern.permute.xlu0 1
  %324 = vperm.xlu0 %323, %v40
  %v325 = vpop.permute.xlu0 %324
  %327 = vset.pattern.permute.xlu0 1
  %328 = vperm.xlu0 %327, %v41
  %v329 = vpop.permute.xlu0 %328
  %331 = vset.pattern.permute.xlu0 1
  %332 = vperm.xlu0 %331, %v42
  %v333 = vpop.permute.xlu0 %332
  %335 = vset.pattern.permute.xlu0 1
  %336 = vperm.xlu0 %335, %v43
  %v337 = vpop.permute.xlu0 %336
  %339 = vset.pattern.permute.xlu0 1
  %340 = vperm.xlu0 %339, %v44
  %v341 = vpop.permute.xlu0 %340
  %v343 = vperm.slane %v67, 1
  %v344 = vperm.slane %v67, 3
  %v345 = vperm.slane %v67, 5
  %v346 = vperm.slane %v67, 7
  %v351 = vperm.slane %v343, 1
  %v352 = vperm.slane %v344, 1
  %v353 = vperm.slane %v345, 1
  %v354 = vperm.slane %v346, 1
  %v355 = vmul.f32 %v321, %v351
  %v356 = vmul.f32 %v321, %v352
  %v357 = vmul.f32 %v321, %v353
  %v358 = vmul.f32 %v321, %v354
  %v359 = vmul.f32 %v325, %v351
  %v360 = vmul.f32 %v325, %v352
  %v361 = vmul.f32 %v325, %v353
  %v362 = vmul.f32 %v325, %v354
  %v363 = vmul.f32 %v329, %v351
  %v364 = vmul.f32 %v329, %v352
  %v365 = vmul.f32 %v329, %v353
  %v366 = vmul.f32 %v329, %v354
  %v367 = vmul.f32 %v333, %v351
  %v368 = vmul.f32 %v333, %v352
  %v369 = vmul.f32 %v333, %v353
  %v370 = vmul.f32 %v333, %v354
  %v371 = vmul.f32 %v337, %v351
  %v372 = vmul.f32 %v337, %v352
  %v373 = vmul.f32 %v337, %v353
  %v374 = vmul.f32 %v337, %v354
  %v375 = vmul.f32 %v341, %v351
  %v376 = vmul.f32 %v341, %v352
  %v377 = vmul.f32 %v341, %v353
  %v378 = vmul.f32 %v341, %v354
  %v379 = vadd.f32 %v174, %v355
  %v380 = vadd.f32 %v175, %v356
  %v381 = vadd.f32 %v176, %v357
  %v382 = vadd.f32 %v177, %v358
  %v383 = vadd.f32 %v178, %v359
  %v384 = vadd.f32 %v179, %v360
  %v385 = vadd.f32 %v180, %v361
  %v386 = vadd.f32 %v181, %v362
  %v387 = vadd.f32 %v182, %v363
  %v388 = vadd.f32 %v183, %v364
  %v389 = vadd.f32 %v184, %v365
  %v390 = vadd.f32 %v185, %v366
  %v391 = vadd.f32 %v186, %v367
  %v392 = vadd.f32 %v187, %v368
  %v393 = vadd.f32 %v188, %v369
  %v394 = vadd.f32 %v189, %v370
  %v395 = vadd.f32 %v190, %v371
  %v396 = vadd.f32 %v191, %v372
  %v397 = vadd.f32 %v192, %v373
  %v398 = vadd.f32 %v193, %v374
  %v399 = vadd.f32 %v194, %v375
  %v400 = vadd.f32 %v195, %v376
  %v401 = vadd.f32 %v196, %v377
  %v402 = vadd.f32 %v197, %v378
  %403 = vset.pattern.permute.xlu0 1
  %404 = vperm.xlu0 %403, %v45
  %v405 = vpop.permute.xlu0 %404
  %407 = vset.pattern.permute.xlu0 1
  %408 = vperm.xlu0 %407, %v46
  %v409 = vpop.permute.xlu0 %408
  %411 = vset.pattern.permute.xlu0 1
  %412 = vperm.xlu0 %411, %v47
  %v413 = vpop.permute.xlu0 %412
  %415 = vset.pattern.permute.xlu0 1
  %416 = vperm.xlu0 %415, %v48
  %v417 = vpop.permute.xlu0 %416
  %419 = vset.pattern.permute.xlu0 1
  %420 = vperm.xlu0 %419, %v49
  %v421 = vpop.permute.xlu0 %420
  %423 = vset.pattern.permute.xlu0 1
  %424 = vperm.xlu0 %423, %v50
  %v425 = vpop.permute.xlu0 %424
  %v427 = vperm.slane %v75, 1
  %v428 = vperm.slane %v75, 3
  %v429 = vperm.slane %v75, 5
  %v430 = vperm.slane %v75, 7
  %v435 = vperm.slane %v427, 1
  %v436 = vperm.slane %v428, 1
  %v437 = vperm.slane %v429, 1
  %v438 = vperm.slane %v430, 1
  %v439 = vmul.f32 %v405, %v435
  %v440 = vmul.f32 %v405, %v436
  %v441 = vmul.f32 %v405, %v437
  %v442 = vmul.f32 %v405, %v438
  %v443 = vmul.f32 %v409, %v435
  %v444 = vmul.f32 %v409, %v436
  %v445 = vmul.f32 %v409, %v437
  %v446 = vmul.f32 %v409, %v438
  %v447 = vmul.f32 %v413, %v435
  %v448 = vmul.f32 %v413, %v436
  %v449 = vmul.f32 %v413, %v437
  %v450 = vmul.f32 %v413, %v438
  %v451 = vmul.f32 %v417, %v435
  %v452 = vmul.f32 %v417, %v436
  %v453 = vmul.f32 %v417, %v437
  %v454 = vmul.f32 %v417, %v438
  %v455 = vmul.f32 %v421, %v435
  %v456 = vmul.f32 %v421, %v436
  %v457 = vmul.f32 %v421, %v437
  %v458 = vmul.f32 %v421, %v438
  %v459 = vmul.f32 %v425, %v435
  %v460 = vmul.f32 %v425, %v436
  %v461 = vmul.f32 %v425, %v437
  %v462 = vmul.f32 %v425, %v438
  %v463 = vadd.f32 %v295, %v439
  %v464 = vadd.f32 %v296, %v440
  %v465 = vadd.f32 %v297, %v441
  %v466 = vadd.f32 %v298, %v442
  %v467 = vadd.f32 %v299, %v443
  %v468 = vadd.f32 %v300, %v444
  %v469 = vadd.f32 %v301, %v445
  %v470 = vadd.f32 %v302, %v446
  %v471 = vadd.f32 %v303, %v447
  %v472 = vadd.f32 %v304, %v448
  %v473 = vadd.f32 %v305, %v449
  %v474 = vadd.f32 %v306, %v450
  %v475 = vadd.f32 %v307, %v451
  %v476 = vadd.f32 %v308, %v452
  %v477 = vadd.f32 %v309, %v453
  %v478 = vadd.f32 %v310, %v454
  %v479 = vadd.f32 %v311, %v455
  %v480 = vadd.f32 %v312, %v456
  %v481 = vadd.f32 %v313, %v457
  %v482 = vadd.f32 %v314, %v458
  %v483 = vadd.f32 %v315, %v459
  %v484 = vadd.f32 %v316, %v460
  %v485 = vadd.f32 %v317, %v461
  %v486 = vadd.f32 %v318, %v462
  %v487 = vmax.f32 %v379, 0.0
  %v488 = vmax.f32 %v380, 0.0
  %v489 = vmax.f32 %v381, 0.0
  %v490 = vmax.f32 %v382, 0.0
  %v491 = vmax.f32 %v383, 0.0
  %v492 = vmax.f32 %v384, 0.0
  %v493 = vmax.f32 %v385, 0.0
  %v494 = vmax.f32 %v386, 0.0
  %v495 = vmax.f32 %v387, 0.0
  %v496 = vmax.f32 %v388, 0.0
  %v497 = vmax.f32 %v389, 0.0
  %v498 = vmax.f32 %v390, 0.0
  %v499 = vmax.f32 %v391, 0.0
  %v500 = vmax.f32 %v392, 0.0
  %v501 = vmax.f32 %v393, 0.0
  %v502 = vmax.f32 %v394, 0.0
  %v503 = vmax.f32 %v395, 0.0
  %v504 = vmax.f32 %v396, 0.0
  %v505 = vmax.f32 %v397, 0.0
  %v506 = vmax.f32 %v398, 0.0
  %v507 = vmax.f32 %v399, 0.0
  %v508 = vmax.f32 %v400, 0.0
  %v509 = vmax.f32 %v401, 0.0
  %v510 = vmax.f32 %v402, 0.0
  %v511 = vmax.f32 %v463, 0.0
  %v512 = vmax.f32 %v464, 0.0
  %v513 = vmax.f32 %v465, 0.0
  %v514 = vmax.f32 %v466, 0.0
  %v515 = vmax.f32 %v467, 0.0
  %v516 = vmax.f32 %v468, 0.0
  %v517 = vmax.f32 %v469, 0.0
  %v518 = vmax.f32 %v470, 0.0
  %v519 = vmax.f32 %v471, 0.0
  %v520 = vmax.f32 %v472, 0.0
  %v521 = vmax.f32 %v473, 0.0
  %v522 = vmax.f32 %v474, 0.0
  %v523 = vmax.f32 %v475, 0.0
  %v524 = vmax.f32 %v476, 0.0
  %v525 = vmax.f32 %v477, 0.0
  %v526 = vmax.f32 %v478, 0.0
  %v527 = vmax.f32 %v479, 0.0
  %v528 = vmax.f32 %v480, 0.0
  %v529 = vmax.f32 %v481, 0.0
  %v530 = vmax.f32 %v482, 0.0
  %v531 = vmax.f32 %v483, 0.0
  %v532 = vmax.f32 %v484, 0.0
  %v533 = vmax.f32 %v485, 0.0
  %v534 = vmax.f32 %v486, 0.0
  %v535 = vadd.f32 %v487, %v511
  %v536 = vadd.f32 %v488, %v512
  %v537 = vadd.f32 %v489, %v513
  %v538 = vadd.f32 %v490, %v514
  %v539 = vadd.f32 %v491, %v515
  %v540 = vadd.f32 %v492, %v516
  %v541 = vadd.f32 %v493, %v517
  %v542 = vadd.f32 %v494, %v518
  %v543 = vadd.f32 %v495, %v519
  %v544 = vadd.f32 %v496, %v520
  %v545 = vadd.f32 %v497, %v521
  %v546 = vadd.f32 %v498, %v522
  %v547 = vadd.f32 %v499, %v523
  %v548 = vadd.f32 %v500, %v524
  %v549 = vadd.f32 %v501, %v525
  %v550 = vadd.f32 %v502, %v526
  %v551 = vadd.f32 %v503, %v527
  %v552 = vadd.f32 %v504, %v528
  %v553 = vadd.f32 %v505, %v529
  %v554 = vadd.f32 %v506, %v530
  %v555 = vadd.f32 %v507, %v531
  %v556 = vadd.f32 %v508, %v532
  %v557 = vadd.f32 %v509, %v533
  %v558 = vadd.f32 %v510, %v534
  %559 = vst [vmem:[%s10] sm:$0xff] %v535
  %560 = vst [vmem:[%s10 + $0x8] sm:$0xff] %v536
  %561 = vst [vmem:[%s10 + $0x10] sm:$0xff] %v537
  %vm562 = vcmask 130048
  %563 = vst.msk [vmem:[%s10 + $0x18] sm:$0xff] %vm562, %v538
  %564 = vst [vmem:[%s10 + $0x20] sm:$0xff] %v539
  %565 = vst [vmem:[%s10 + $0x28] sm:$0xff] %v540
  %566 = vst [vmem:[%s10 + $0x30] sm:$0xff] %v541
  %567 = vst.msk [vmem:[%s10 + $0x38] sm:$0xff] %vm562, %v542
  %568 = vst [vmem:[%s10 + $0x40] sm:$0xff] %v543
  %569 = vst [vmem:[%s10 + $0x48] sm:$0xff] %v544
  %570 = vst [vmem:[%s10 + $0x50] sm:$0xff] %v545
  %571 = vst.msk [vmem:[%s10 + $0x58] sm:$0xff] %vm562, %v546
  %572 = vst [vmem:[%s10 + $0x60] sm:$0xff] %v547
  %573 = vst [vmem:[%s10 + $0x68] sm:$0xff] %v548
  %574 = vst [vmem:[%s10 + $0x70] sm:$0xff] %v549
  %575 = vst.msk [vmem:[%s10 + $0x78] sm:$0xff] %vm562, %v550
  %576 = vst [vmem:[%s10 + $0x80] sm:$0xff] %v551
  %577 = vst [vmem:[%s10 + $0x88] sm:$0xff] %v552
  %578 = vst [vmem:[%s10 + $0x90] sm:$0xff] %v553
  %579 = vst.msk [vmem:[%s10 + $0x98] sm:$0xff] %vm562, %v554
  %580 = vst [vmem:[%s10 + $0xa0] sm:$0xff] %v555
  %581 = vst [vmem:[%s10 + $0xa8] sm:$0xff] %v556
  %582 = vst [vmem:[%s10 + $0xb0] sm:$0xff] %v557
  %583 = vst.msk [vmem:[%s10 + $0xb8] sm:$0xff] %vm562, %v558
  %v585 = vperm.slane %v68, 0
  %v586 = vperm.slane %v68, 2
  %v587 = vperm.slane %v68, 4
  %v588 = vperm.slane %v68, 6
  %v593 = vperm.slane %v585, 0
  %v594 = vperm.slane %v586, 0
  %v595 = vperm.slane %v587, 0
  %v596 = vperm.slane %v588, 0
  %v597 = vmul.f32 %v80, %v593
  %v598 = vmul.f32 %v80, %v594
  %v599 = vmul.f32 %v80, %v595
  %v600 = vmul.f32 %v80, %v596
  %v601 = vmul.f32 %v85, %v593
  %v602 = vmul.f32 %v85, %v594
  %v603 = vmul.f32 %v85, %v595
  %v604 = vmul.f32 %v85, %v596
  %v605 = vmul.f32 %v90, %v593
  %v606 = vmul.f32 %v90, %v594
  %v607 = vmul.f32 %v90, %v595
  %v608 = vmul.f32 %v90, %v596
  %v609 = vmul.f32 %v95, %v593
  %v610 = vmul.f32 %v95, %v594
  %v611 = vmul.f32 %v95, %v595
  %v612 = vmul.f32 %v95, %v596
  %v613 = vmul.f32 %v100, %v593
  %v614 = vmul.f32 %v100, %v594
  %v615 = vmul.f32 %v100, %v595
  %v616 = vmul.f32 %v100, %v596
  %v617 = vmul.f32 %v105, %v593
  %v618 = vmul.f32 %v105, %v594
  %v619 = vmul.f32 %v105, %v595
  %v620 = vmul.f32 %v105, %v596
  %v621 = vadd.f32 %v147, %v597
  %v622 = vadd.f32 %v147, %v598
  %v623 = vadd.f32 %v147, %v599
  %v624 = vadd.f32 %v147, %v600
  %v625 = vadd.f32 %v152, %v601
  %v626 = vadd.f32 %v152, %v602
  %v627 = vadd.f32 %v152, %v603
  %v628 = vadd.f32 %v152, %v604
  %v629 = vadd.f32 %v157, %v605
  %v630 = vadd.f32 %v157, %v606
  %v631 = vadd.f32 %v157, %v607
  %v632 = vadd.f32 %v157, %v608
  %v633 = vadd.f32 %v162, %v609
  %v634 = vadd.f32 %v162, %v610
  %v635 = vadd.f32 %v162, %v611
  %v636 = vadd.f32 %v162, %v612
  %v637 = vadd.f32 %v167, %v613
  %v638 = vadd.f32 %v167, %v614
  %v639 = vadd.f32 %v167, %v615
  %v640 = vadd.f32 %v167, %v616
  %v641 = vadd.f32 %v172, %v617
  %v642 = vadd.f32 %v172, %v618
  %v643 = vadd.f32 %v172, %v619
  %v644 = vadd.f32 %v172, %v620
  %v646 = vperm.slane %v76, 0
  %v647 = vperm.slane %v76, 2
  %v648 = vperm.slane %v76, 4
  %v649 = vperm.slane %v76, 6
  %v654 = vperm.slane %v646, 0
  %v655 = vperm.slane %v647, 0
  %v656 = vperm.slane %v648, 0
  %v657 = vperm.slane %v649, 0
  %v658 = vmul.f32 %v201, %v654
  %v659 = vmul.f32 %v201, %v655
  %v660 = vmul.f32 %v201, %v656
  %v661 = vmul.f32 %v201, %v657
  %v662 = vmul.f32 %v206, %v654
  %v663 = vmul.f32 %v206, %v655
  %v664 = vmul.f32 %v206, %v656
  %v665 = vmul.f32 %v206, %v657
  %v666 = vmul.f32 %v211, %v654
  %v667 = vmul.f32 %v211, %v655
  %v668 = vmul.f32 %v211, %v656
  %v669 = vmul.f32 %v211, %v657
  %v670 = vmul.f32 %v216, %v654
  %v671 = vmul.f32 %v216, %v655
  %v672 = vmul.f32 %v216, %v656
  %v673 = vmul.f32 %v216, %v657
  %v674 = vmul.f32 %v221, %v654
  %v675 = vmul.f32 %v221, %v655
  %v676 = vmul.f32 %v221, %v656
  %v677 = vmul.f32 %v221, %v657
  %v678 = vmul.f32 %v226, %v654
  %v679 = vmul.f32 %v226, %v655
  %v680 = vmul.f32 %v226, %v656
  %v681 = vmul.f32 %v226, %v657
  %v682 = vadd.f32 %v268, %v658
  %v683 = vadd.f32 %v268, %v659
  %v684 = vadd.f32 %v268, %v660
  %v685 = vadd.f32 %v268, %v661
  %v686 = vadd.f32 %v273, %v662
  %v687 = vadd.f32 %v273, %v663
  %v688 = vadd.f32 %v273, %v664
  %v689 = vadd.f32 %v273, %v665
  %v690 = vadd.f32 %v278, %v666
  %v691 = vadd.f32 %v278, %v667
  %v692 = vadd.f32 %v278, %v668
  %v693 = vadd.f32 %v278, %v669
  %v694 = vadd.f32 %v283, %v670
  %v695 = vadd.f32 %v283, %v671
  %v696 = vadd.f32 %v283, %v672
  %v697 = vadd.f32 %v283, %v673
  %v698 = vadd.f32 %v288, %v674
  %v699 = vadd.f32 %v288, %v675
  %v700 = vadd.f32 %v288, %v676
  %v701 = vadd.f32 %v288, %v677
  %v702 = vadd.f32 %v293, %v678
  %v703 = vadd.f32 %v293, %v679
  %v704 = vadd.f32 %v293, %v680
  %v705 = vadd.f32 %v293, %v681
  %v706 = vperm.slane %v68, 1
  %v707 = vperm.slane %v68, 3
  %v708 = vperm.slane %v68, 5
  %v709 = vperm.slane %v68, 7
  %v714 = vperm.slane %v706, 1
  %v715 = vperm.slane %v707, 1
  %v716 = vperm.slane %v708, 1
  %v717 = vperm.slane %v709, 1
  %v718 = vmul.f32 %v321, %v714
  %v719 = vmul.f32 %v321, %v715
  %v720 = vmul.f32 %v321, %v716
  %v721 = vmul.f32 %v321, %v717
  %v722 = vmul.f32 %v325, %v714
  %v723 = vmul.f32 %v325, %v715
  %v724 = vmul.f32 %v325, %v716
  %v725 = vmul.f32 %v325, %v717
  %v726 = vmul.f32 %v329, %v714
  %v727 = vmul.f32 %v329, %v715
  %v728 = vmul.f32 %v329, %v716
  %v729 = vmul.f32 %v329, %v717
  %v730 = vmul.f32 %v333, %v714
  %v731 = vmul.f32 %v333, %v715
  %v732 = vmul.f32 %v333, %v716
  %v733 = vmul.f32 %v333, %v717
  %v734 = vmul.f32 %v337, %v714
  %v735 = vmul.f32 %v337, %v715
  %v736 = vmul.f32 %v337, %v716
  %v737 = vmul.f32 %v337, %v717
  %v738 = vmul.f32 %v341, %v714
  %v739 = vmul.f32 %v341, %v715
  %v740 = vmul.f32 %v341, %v716
  %v741 = vmul.f32 %v341, %v717
  %v742 = vadd.f32 %v621, %v718
  %v743 = vadd.f32 %v622, %v719
  %v744 = vadd.f32 %v623, %v720
  %v745 = vadd.f32 %v624, %v721
  %v746 = vadd.f32 %v625, %v722
  %v747 = vadd.f32 %v626, %v723
  %v748 = vadd.f32 %v627, %v724
  %v749 = vadd.f32 %v628, %v725
  %v750 = vadd.f32 %v629, %v726
  %v751 = vadd.f32 %v630, %v727
  %v752 = vadd.f32 %v631, %v728
  %v753 = vadd.f32 %v632, %v729
  %v754 = vadd.f32 %v633, %v730
  %v755 = vadd.f32 %v634, %v731
  %v756 = vadd.f32 %v635, %v732
  %v757 = vadd.f32 %v636, %v733
  %v758 = vadd.f32 %v637, %v734
  %v759 = vadd.f32 %v638, %v735
  %v760 = vadd.f32 %v639, %v736
  %v761 = vadd.f32 %v640, %v737
  %v762 = vadd.f32 %v641, %v738
  %v763 = vadd.f32 %v642, %v739
  %v764 = vadd.f32 %v643, %v740
  %v765 = vadd.f32 %v644, %v741
  %v766 = vperm.slane %v76, 1
  %v767 = vperm.slane %v76, 3
  %v768 = vperm.slane %v76, 5
  %v769 = vperm.slane %v76, 7
  %v774 = vperm.slane %v766, 1
  %v775 = vperm.slane %v767, 1
  %v776 = vperm.slane %v768, 1
  %v777 = vperm.slane %v769, 1
  %v778 = vmul.f32 %v405, %v774
  %v779 = vmul.f32 %v405, %v775
  %v780 = vmul.f32 %v405, %v776
  %v781 = vmul.f32 %v405, %v777
  %v782 = vmul.f32 %v409, %v774
  %v783 = vmul.f32 %v409, %v775
  %v784 = vmul.f32 %v409, %v776
  %v785 = vmul.f32 %v409, %v777
  %v786 = vmul.f32 %v413, %v774
  %v787 = vmul.f32 %v413, %v775
  %v788 = vmul.f32 %v413, %v776
  %v789 = vmul.f32 %v413, %v777
  %v790 = vmul.f32 %v417, %v774
  %v791 = vmul.f32 %v417, %v775
  %v792 = vmul.f32 %v417, %v776
  %v793 = vmul.f32 %v417, %v777
  %v794 = vmul.f32 %v421, %v774
  %v795 = vmul.f32 %v421, %v775
  %v796 = vmul.f32 %v421, %v776
  %v797 = vmul.f32 %v421, %v777
  %v798 = vmul.f32 %v425, %v774
  %v799 = vmul.f32 %v425, %v775
  %v800 = vmul.f32 %v425, %v776
  %v801 = vmul.f32 %v425, %v777
  %v802 = vadd.f32 %v682, %v778
  %v803 = vadd.f32 %v683, %v779
  %v804 = vadd.f32 %v684, %v780
  %v805 = vadd.f32 %v685, %v781
  %v806 = vadd.f32 %v686, %v782
  %v807 = vadd.f32 %v687, %v783
  %v808 = vadd.f32 %v688, %v784
  %v809 = vadd.f32 %v689, %v785
  %v810 = vadd.f32 %v690, %v786
  %v811 = vadd.f32 %v691, %v787
  %v812 = vadd.f32 %v692, %v788
  %v813 = vadd.f32 %v693, %v789
  %v814 = vadd.f32 %v694, %v790
  %v815 = vadd.f32 %v695, %v791
  %v816 = vadd.f32 %v696, %v792
  %v817 = vadd.f32 %v697, %v793
  %v818 = vadd.f32 %v698, %v794
  %v819 = vadd.f32 %v699, %v795
  %v820 = vadd.f32 %v700, %v796
  %v821 = vadd.f32 %v701, %v797
  %v822 = vadd.f32 %v702, %v798
  %v823 = vadd.f32 %v703, %v799
  %v824 = vadd.f32 %v704, %v800
  %v825 = vadd.f32 %v705, %v801
  %v826 = vmax.f32 %v742, 0.0
  %v827 = vmax.f32 %v743, 0.0
  %v828 = vmax.f32 %v744, 0.0
  %v829 = vmax.f32 %v745, 0.0
  %v830 = vmax.f32 %v746, 0.0
  %v831 = vmax.f32 %v747, 0.0
  %v832 = vmax.f32 %v748, 0.0
  %v833 = vmax.f32 %v749, 0.0
  %v834 = vmax.f32 %v750, 0.0
  %v835 = vmax.f32 %v751, 0.0
  %v836 = vmax.f32 %v752, 0.0
  %v837 = vmax.f32 %v753, 0.0
  %v838 = vmax.f32 %v754, 0.0
  %v839 = vmax.f32 %v755, 0.0
  %v840 = vmax.f32 %v756, 0.0
  %v841 = vmax.f32 %v757, 0.0
  %v842 = vmax.f32 %v758, 0.0
  %v843 = vmax.f32 %v759, 0.0
  %v844 = vmax.f32 %v760, 0.0
  %v845 = vmax.f32 %v761, 0.0
  %v846 = vmax.f32 %v762, 0.0
  %v847 = vmax.f32 %v763, 0.0
  %v848 = vmax.f32 %v764, 0.0
  %v849 = vmax.f32 %v765, 0.0
  %v850 = vmax.f32 %v802, 0.0
  %v851 = vmax.f32 %v803, 0.0
  %v852 = vmax.f32 %v804, 0.0
  %v853 = vmax.f32 %v805, 0.0
  %v854 = vmax.f32 %v806, 0.0
  %v855 = vmax.f32 %v807, 0.0
  %v856 = vmax.f32 %v808, 0.0
  %v857 = vmax.f32 %v809, 0.0
  %v858 = vmax.f32 %v810, 0.0
  %v859 = vmax.f32 %v811, 0.0
  %v860 = vmax.f32 %v812, 0.0
  %v861 = vmax.f32 %v813, 0.0
  %v862 = vmax.f32 %v814, 0.0
  %v863 = vmax.f32 %v815, 0.0
  %v864 = vmax.f32 %v816, 0.0
  %v865 = vmax.f32 %v817, 0.0
  %v866 = vmax.f32 %v818, 0.0
  %v867 = vmax.f32 %v819, 0.0
  %v868 = vmax.f32 %v820, 0.0
  %v869 = vmax.f32 %v821, 0.0
  %v870 = vmax.f32 %v822, 0.0
  %v871 = vmax.f32 %v823, 0.0
  %v872 = vmax.f32 %v824, 0.0
  %v873 = vmax.f32 %v825, 0.0
  %v874 = vadd.f32 %v826, %v850
  %v875 = vadd.f32 %v827, %v851
  %v876 = vadd.f32 %v828, %v852
  %v877 = vadd.f32 %v829, %v853
  %v878 = vadd.f32 %v830, %v854
  %v879 = vadd.f32 %v831, %v855
  %v880 = vadd.f32 %v832, %v856
  %v881 = vadd.f32 %v833, %v857
  %v882 = vadd.f32 %v834, %v858
  %v883 = vadd.f32 %v835, %v859
  %v884 = vadd.f32 %v836, %v860
  %v885 = vadd.f32 %v837, %v861
  %v886 = vadd.f32 %v838, %v862
  %v887 = vadd.f32 %v839, %v863
  %v888 = vadd.f32 %v840, %v864
  %v889 = vadd.f32 %v841, %v865
  %v890 = vadd.f32 %v842, %v866
  %v891 = vadd.f32 %v843, %v867
  %v892 = vadd.f32 %v844, %v868
  %v893 = vadd.f32 %v845, %v869
  %v894 = vadd.f32 %v846, %v870
  %v895 = vadd.f32 %v847, %v871
  %v896 = vadd.f32 %v848, %v872
  %v897 = vadd.f32 %v849, %v873
  %s898 = scalar_lea.vmem %s10, 192
  %899 = vst [vmem:[%s898] sm:$0xff] %v874
  %900 = vst [vmem:[%s898 + $0x8] sm:$0xff] %v875
  %901 = vst [vmem:[%s898 + $0x10] sm:$0xff] %v876
  %902 = vst.msk [vmem:[%s898 + $0x18] sm:$0xff] %vm562, %v877
  %903 = vst [vmem:[%s898 + $0x20] sm:$0xff] %v878
  %904 = vst [vmem:[%s898 + $0x28] sm:$0xff] %v879
  %905 = vst [vmem:[%s898 + $0x30] sm:$0xff] %v880
  %906 = vst.msk [vmem:[%s898 + $0x38] sm:$0xff] %vm562, %v881
  %907 = vst [vmem:[%s898 + $0x40] sm:$0xff] %v882
  %908 = vst [vmem:[%s898 + $0x48] sm:$0xff] %v883
  %909 = vst [vmem:[%s898 + $0x50] sm:$0xff] %v884
  %910 = vst.msk [vmem:[%s898 + $0x58] sm:$0xff] %vm562, %v885
  %911 = vst [vmem:[%s898 + $0x60] sm:$0xff] %v886
  %912 = vst [vmem:[%s898 + $0x68] sm:$0xff] %v887
  %913 = vst [vmem:[%s898 + $0x70] sm:$0xff] %v888
  %914 = vst.msk [vmem:[%s898 + $0x78] sm:$0xff] %vm562, %v889
  %915 = vst [vmem:[%s898 + $0x80] sm:$0xff] %v890
  %916 = vst [vmem:[%s898 + $0x88] sm:$0xff] %v891
  %917 = vst [vmem:[%s898 + $0x90] sm:$0xff] %v892
  %918 = vst.msk [vmem:[%s898 + $0x98] sm:$0xff] %vm562, %v893
  %919 = vst [vmem:[%s898 + $0xa0] sm:$0xff] %v894
  %920 = vst [vmem:[%s898 + $0xa8] sm:$0xff] %v895
  %921 = vst [vmem:[%s898 + $0xb0] sm:$0xff] %v896
  %922 = vst.msk [vmem:[%s898 + $0xb8] sm:$0xff] %vm562, %v897
  // Predicated region
  $region42: #{embed_dy.1} parent=0 // pred_check
    _
  $region43: #{embed_dy.1} parent=0 // pred_check_branch
    %924 = sbr.rel (0) target = $region45
  $region44: #{embed_dy.1} parent=0 // pred_region
    _
  $region45: #{embed_dy.1} parent=0 // pred_fallthru
    _
  // Predicated region
  $region46: #{embed_dy.1} parent=0 // pred_check
    _
  $region47: #{embed_dy.1} parent=0 // pred_check_branch
    %926 = sbr.rel (0) target = $region49
  $region48: #{embed_dy.1} parent=0 // pred_region
    _
  $region49: #{embed_dy.1} parent=0 // pred_fallthru
    _

</llo_original>
